<compile_context>
chip_gen: v7x
topology: tpu7x:2x2x1
jax: 0.10.0
libtpu: 0.0.40
codegen_flags: <defaults>
</compile_context>

<pallas_src>
import math

import jax
import jax.numpy as jnp
from jax import lax
from jax.experimental import pallas as pl
from jax.experimental.pallas import tpu as pltpu

LN_EPS = 1e-5                    # config.layer_norm_eps
_INV_SQRT2 = 1.0 / math.sqrt(2.0)


def _round_up(x, m):
    return (x + m - 1) // m * m


def _vmem_limit_bytes():
    """Per-generation VMEM budget (don't hard-code a v7x-sized constant)."""
    try:
        cap = int(pltpu.get_tpu_info().vmem_capacity_bytes)
    except Exception:
        cap = 64 * 1024 * 1024                     # conservative fallback
    # ~85% of physical, clamped to [32 MiB, 110 MiB].
    return max(32 << 20, min(int(cap * 0.85), 110 << 20))


# ---------------------------------------------------------------------------
# gelu (exact, erf-based) + LayerNorm, all in f32.
# ---------------------------------------------------------------------------
def _gelu_layernorm(h, b1, gamma, beta):
    h = h + b1                                      # (1, H) broadcasts
    h = 0.5 * h * (1.0 + lax.erf(h * _INV_SQRT2))
    mean = jnp.mean(h, axis=-1, keepdims=True)
    c = h - mean
    var = jnp.mean(c * c, axis=-1, keepdims=True)
    return c * lax.rsqrt(var + LN_EPS) * gamma + beta


# ---------------------------------------------------------------------------
# Pass 1: h = LayerNorm(gelu(x @ W1 + b1))   (bf16 operands, f32 math, bf16 out)
# ---------------------------------------------------------------------------
def _hidden_kernel(x_ref, w1_ref, b1_ref, gamma_ref, beta_ref, h_ref):
    h = jnp.dot(x_ref[...], w1_ref[...], preferred_element_type=jnp.float32)
    h = _gelu_layernorm(h, b1_ref[...], gamma_ref[...], beta_ref[...])
    h_ref[...] = h.astype(h_ref.dtype)


# ---------------------------------------------------------------------------
# Pass 2 (streaming h): logits tile = h_rows @ W2_tile + b2_tile
# ---------------------------------------------------------------------------
def _decoder_stream_kernel(h_ref, w2_ref, b2_ref, out_ref):
    out = jnp.dot(h_ref[...], w2_ref[...], preferred_element_type=jnp.float32)
    out_ref[...] = (out + b2_ref[...]).astype(out_ref.dtype)


# ---------------------------------------------------------------------------
# Pass 2 (resident h): h is a full-array VMEM block (DMA'd once); slice rows.
# ---------------------------------------------------------------------------
def _decoder_resident_kernel(h_ref, w2_ref, b2_ref, out_ref):
    tm = out_ref.shape[0]
    row0 = pl.multiple_of(pl.program_id(1) * tm, tm)
    h_rows = h_ref[pl.ds(row0, tm), :]
    out = jnp.dot(h_rows, w2_ref[...], preferred_element_type=jnp.float32)
    out_ref[...] = (out + b2_ref[...]).astype(out_ref.dtype)


# ---------------------------------------------------------------------------
# Fully fused small-M path: single kernel gridded only over vocab tiles.
# h is computed once (at the first vocab step) into a VMEM scratch.
# ---------------------------------------------------------------------------
def _fused_small_m_kernel(x_ref, w1_ref, b1_ref, gamma_ref, beta_ref,
                          w2_ref, b2_ref, out_ref, h_scratch):
    @pl.when(pl.program_id(0) == 0)
    def _():
        h = jnp.dot(x_ref[...], w1_ref[...],
                    preferred_element_type=jnp.float32)
        h = _gelu_layernorm(h, b1_ref[...], gamma_ref[...], beta_ref[...])
        h_scratch[...] = h.astype(h_scratch.dtype)

    out = jnp.dot(h_scratch[...], w2_ref[...],
                  preferred_element_type=jnp.float32)
    out_ref[...] = (out + b2_ref[...]).astype(out_ref.dtype)


def roberta_lm_head(features, w1, b1, gamma, beta, w2, b2, *,
                    tm=512, tv=None, out_dtype=jnp.bfloat16,
                    max_resident_h_bytes=None):
    """features: [B, S, H].  Returns [B, S, V] in `out_dtype` (default bf16)."""
    B, S, H = features.shape
    Hw, V = w2.shape
    assert Hw == H and w1.shape == (H, H)
    assert H % 128 == 0, "hidden size must be a multiple of 128"
    M = B * S

    vmem_limit = _vmem_limit_bytes()
    out_isz = jnp.dtype(out_dtype).itemsize

    # Row tile: multiple of 16 (native bf16 sublane tile), clamped to problem.
    tm = _round_up(max(16, min(tm, _round_up(M, 16))), 16)
    n_rt = pl.cdiv(M, tm)
    M_pad = n_rt * tm                               # only h / x are padded

    # Vocab tile: multiple of 128, clamped.
    v_cap = _round_up(V, 128)
    tv_user = None if tv is None else _round_up(max(128, min(tv, v_cap)), 128)

    # bf16 MXU operands (f32 accumulation inside the kernels).
    x2d = features.reshape(M, H).astype(jnp.bfloat16)
    if M_pad != M:
        x2d = jnp.pad(x2d, ((0, M_pad - M), (0, 0)))
    w1_bf = w1.astype(jnp.bfloat16)
    w2_bf = w2.astype(jnp.bfloat16)
    b1_2d = b1.reshape(1, H).astype(jnp.float32)
    gamma_2d = gamma.reshape(1, H).astype(jnp.float32)
    beta_2d = beta.reshape(1, H).astype(jnp.float32)
    b2_2d = b2.reshape(1, V).astype(jnp.float32)

    # ---- small-M fused path: h never round-trips through HBM --------------
    if n_rt == 1:
        tv_f = tv_user if tv_user is not None else min(1024, v_cap)
        fused_vmem = (2 * M_pad * H * 2 + 2 * H * H * 2 + 2 * H * tv_f * 2
                      + 2 * M_pad * tv_f * out_isz + M_pad * H * 2
                      + 2 * tv_f * 4 + 6 * H * 4 + (2 << 20))
        if fused_vmem <= vmem_limit:
            out = pl.pallas_call(
                _fused_small_m_kernel,
                out_shape=jax.ShapeDtypeStruct((M, V), out_dtype),
                grid_spec=pltpu.PrefetchScalarGridSpec(
                    num_scalar_prefetch=0,
                    grid=(pl.cdiv(V, tv_f),),
                    in_specs=[
                        pl.BlockSpec((M_pad, H), lambda j: (0, 0)),  # x
                        pl.BlockSpec((H, H), lambda j: (0, 0)),      # W1
                        pl.BlockSpec((1, H), lambda j: (0, 0)),      # b1
                        pl.BlockSpec((1, H), lambda j: (0, 0)),      # gamma
                        pl.BlockSpec((1, H), lambda j: (0, 0)),      # beta
                        pl.BlockSpec((H, tv_f), lambda j: (0, j)),   # W2 tile
                        pl.BlockSpec((1, tv_f), lambda j: (0, j)),   # b2 tile
                    ],
                    out_specs=pl.BlockSpec((M_pad, tv_f), lambda j: (0, j)),
                    scratch_shapes=[pltpu.VMEM((M_pad, H), jnp.bfloat16)],
                ),
                compiler_params=pltpu.CompilerParams(
                    # h is produced only at j == 0 -> sequential dependency.
                    dimension_semantics=("arbitrary",),
                    vmem_limit_bytes=vmem_limit),
            )(x2d, w1_bf, b1_2d, gamma_2d, beta_2d, w2_bf, b2_2d)
            return out.reshape(B, S, V)

    # ---- pass 1: per-row-tile fused dense + gelu + layernorm -> bf16 h ----
    h = pl.pallas_call(
        _hidden_kernel,
        out_shape=jax.ShapeDtypeStruct((M_pad, H), jnp.bfloat16),
        grid_spec=pltpu.PrefetchScalarGridSpec(
            num_scalar_prefetch=0,
            grid=(n_rt,),
            in_specs=[
                pl.BlockSpec((tm, H), lambda i: (i, 0)),   # x rows (bf16)
                pl.BlockSpec((H, H), lambda i: (0, 0)),    # W1 (bf16)
                pl.BlockSpec((1, H), lambda i: (0, 0)),    # b1
                pl.BlockSpec((1, H), lambda i: (0, 0)),    # gamma
                pl.BlockSpec((1, H), lambda i: (0, 0)),    # beta
            ],
            out_specs=pl.BlockSpec((tm, H), lambda i: (i, 0)),
        ),
        compiler_params=pltpu.CompilerParams(
            dimension_semantics=("parallel",),
            vmem_limit_bytes=vmem_limit),
    )(x2d, w1_bf, b1_2d, gamma_2d, beta_2d)

    # ---- pass 2: logits = h @ W2 + b2.  Vocab is the OUTER grid axis so each
    #      W2 tile is streamed from HBM exactly once.  Output goes straight
    #      into an UN-padded (M, V) buffer (Pallas masks edge blocks). --------
    h_bytes = M_pad * H * 2
    resident_cap = (max_resident_h_bytes if max_resident_h_bytes is not None
                    else vmem_limit // 3)

    h_resident = False
    if h_bytes <= resident_cap:
        tv2 = tv_user if tv_user is not None else min(1024, v_cap)
        need = (2 * h_bytes + 2 * H * tv2 * 2 + 2 * tv2 * 4
                + 2 * tm * tv2 * out_isz + (2 << 20))
        h_resident = need <= vmem_limit
    if not h_resident:
        # h gets re-streamed cdiv(V, tv2) times -> use a bigger vocab tile.
        tv2 = tv_user if tv_user is not None else min(2048, v_cap)

    if h_resident:
        in_specs = [
            pl.BlockSpec((M_pad, H), lambda j, i: (0, 0)),   # h: DMA'd once
            pl.BlockSpec((H, tv2), lambda j, i: (0, j)),     # W2 vocab tile
            pl.BlockSpec((1, tv2), lambda j, i: (0, j)),     # b2 vocab tile
        ]
        kernel = _decoder_resident_kernel
    else:
        in_specs = [
            pl.BlockSpec((tm, H), lambda j, i: (i, 0)),      # h row tile
            # TODO(synk): if a profile shows exposed W2 DMA at the vocab-tile
            # boundary (v6e), add pipeline_mode=pl.Buffered(3) to this spec.
            pl.BlockSpec((H, tv2), lambda j, i: (0, j)),     # W2 vocab tile
            pl.BlockSpec((1, tv2), lambda j, i: (0, j)),     # b2 vocab tile
        ]
        kernel = _decoder_stream_kernel

    out = pl.pallas_call(
        kernel,
        out_shape=jax.ShapeDtypeStruct((M, V), out_dtype),
        grid_spec=pltpu.PrefetchScalarGridSpec(
            num_scalar_prefetch=0,
            grid=(pl.cdiv(V, tv2), n_rt),
            in_specs=in_specs,
            out_specs=pl.BlockSpec((tm, tv2), lambda j, i: (i, j)),
        ),
        compiler_params=pltpu.CompilerParams(
            # Both axes independent -> v7x can shard across its two TCs.
            dimension_semantics=("parallel", "parallel"),
            vmem_limit_bytes=vmem_limit),
    )(h, w2_bf, b2_2d)

    return out.reshape(B, S, V)


# ---------------------------------------------------------------------------
# Pure-JAX reference (f32 everywhere)
# ---------------------------------------------------------------------------
def _reference(features, w1, b1, gamma, beta, w2, b2):
    x = features @ w1 + b1
    x = 0.5 * x * (1.0 + lax.erf(x * _INV_SQRT2))
    mean = jnp.mean(x, axis=-1, keepdims=True)
    var = jnp.mean((x - mean) ** 2, axis=-1, keepdims=True)
    x = (x - mean) * lax.rsqrt(var + LN_EPS) * gamma + beta
    return x @ w2 + b2


if __name__ == "__main__":
    # Small config.  V = 300 is deliberately NOT 128-aligned to exercise the
    # masked vocab-edge path (real RoBERTa vocab 50265 is also unaligned).
    B, S, H, V = 2, 8, 128, 300

    key = jax.random.PRNGKey(0)
    k_feat, k_w1, k_b1, k_g, k_beta, k_w2, k_b2, k_feat2 = jax.random.split(key, 8)

    features = jax.random.normal(k_feat, (B, S, H), dtype=jnp.float32)
    w1 = jax.random.normal(k_w1, (H, H), dtype=jnp.float32) * 0.02
    b1 = jax.random.normal(k_b1, (H,), dtype=jnp.float32) * 0.02
    gamma = 1.0 + 0.1 * jax.random.normal(k_g, (H,), dtype=jnp.float32)
    beta = 0.05 * jax.random.normal(k_beta, (H,), dtype=jnp.float32)
    w2 = jax.random.normal(k_w2, (H, V), dtype=jnp.float32) * 0.02
    b2 = 0.02 * jax.random.normal(k_b2, (V,), dtype=jnp.float32)

    # --- path 1: fully fused small-M kernel (M = 16 <= tm), bf16 logits ----
    ref = _reference(features, w1, b1, gamma, beta, w2, b2)
    out = roberta_lm_head(features, w1, b1, gamma, beta, w2, b2)
    out = jax.block_until_ready(out)
    assert out.shape == (B, S, V) and out.dtype == jnp.bfloat16
    assert jnp.allclose(out.astype(jnp.float32), ref, rtol=2e-2, atol=3e-2), \
        "fused path mismatch vs reference"

    # --- path 2: two-pass, resident-h decoder (force multi row tiles) ------
    B2, S2 = 2, 24                                  # M = 48 > tm = 16
    features2 = jax.random.normal(k_feat2, (B2, S2, H), dtype=jnp.float32)
    ref2 = _reference(features2, w1, b1, gamma, beta, w2, b2)
    out2 = roberta_lm_head(features2, w1, b1, gamma, beta, w2, b2, tm=16)
    out2 = jax.block_until_ready(out2)
    assert out2.shape == (B2, S2, V)
    assert jnp.allclose(out2.astype(jnp.float32), ref2, rtol=2e-2, atol=3e-2), \
        "resident-h path mismatch vs reference"

    # --- path 3: two-pass, streaming-h decoder (f32 logits, small tv) ------
    out3 = roberta_lm_head(features2, w1, b1, gamma, beta, w2, b2,
                           tm=16, tv=128, out_dtype=jnp.float32,
                           max_resident_h_bytes=0)
    out3 = jax.block_until_ready(out3)
    assert out3.shape == (B2, S2, V) and out3.dtype == jnp.float32
    assert jnp.allclose(out3, ref2, rtol=2e-2, atol=3e-2), \
        "streaming-h path mismatch vs reference"

    print("KERNEL_OK")
</pallas_src>

<mosaic_0001>
module attributes {stable_mosaic.version = 11 : i64} {
  func.func @_fused_small_m_kernel(%arg0: i32, %arg1: memref<16x128xbf16, #tpu.memory_space<vmem>>, %arg2: memref<128x128xbf16, #tpu.memory_space<vmem>>, %arg3: memref<1x128xf32, #tpu.memory_space<vmem>>, %arg4: memref<1x128xf32, #tpu.memory_space<vmem>>, %arg5: memref<1x128xf32, #tpu.memory_space<vmem>>, %arg6: memref<128x384xbf16, #tpu.memory_space<vmem>>, %arg7: memref<1x384xf32, #tpu.memory_space<vmem>>, %arg8: memref<16x384xbf16, #tpu.memory_space<vmem>>, %arg9: memref<16x128xbf16, #tpu.memory_space<vmem>>) attributes {dimension_semantics = [#tpu.dimension_semantics<arbitrary>], iteration_bounds = array<i64: 1>, scalar_prefetch = 0 : i64, scratch_operands = 1 : i64, tpu.core_type = #tpu.core_type<tc>, window_params = [{pipeline_mode = #tpu.pipeline_mode<synchronous>, transform_indices = @transform_0, window_bounds = array<i64: 16, 128>}, {pipeline_mode = #tpu.pipeline_mode<synchronous>, transform_indices = @transform_1, window_bounds = array<i64: 128, 128>}, {pipeline_mode = #tpu.pipeline_mode<synchronous>, transform_indices = @transform_2, window_bounds = array<i64: 1, 128>}, {pipeline_mode = #tpu.pipeline_mode<synchronous>, transform_indices = @transform_3, window_bounds = array<i64: 1, 128>}, {pipeline_mode = #tpu.pipeline_mode<synchronous>, transform_indices = @transform_4, window_bounds = array<i64: 1, 128>}, {transform_indices = @transform_5, window_bounds = array<i64: 128, 384>}, {transform_indices = @transform_6, window_bounds = array<i64: 1, 384>}, {transform_indices = @transform_7, window_bounds = array<i64: 16, 384>}]} {
    %c0_i32 = arith.constant 0 : i32
    %0 = arith.cmpi eq, %arg0, %c0_i32 : i32
    %1 = arith.extui %0 : i1 to i32
    %c0_i32_0 = arith.constant 0 : i32
    %2 = arith.cmpi ne, %1, %c0_i32_0 : i32
    scf.if %2 {
      %c0_8 = arith.constant 0 : index
      %c0_9 = arith.constant 0 : index
      %11 = vector.load %arg1[%c0_8, %c0_9] : memref<16x128xbf16, #tpu.memory_space<vmem>>, vector<16x128xbf16>
      %c0_10 = arith.constant 0 : index
      %c0_11 = arith.constant 0 : index
      %12 = vector.load %arg2[%c0_10, %c0_11] : memref<128x128xbf16, #tpu.memory_space<vmem>>, vector<128x128xbf16>
      %cst_12 = arith.constant dense<0.000000e+00> : vector<16x128xf32>
      %13 = tpu.matmul %11, %12, %cst_12 {dimension_numbers = #tpu.dot_dimension_numbers<[1], [0], [0], [1], [0, 0, 1, 1], [], []>} : vector<16x128xbf16>, vector<128x128xbf16>, vector<16x128xf32> -> vector<16x128xf32>
      %c0_13 = arith.constant 0 : index
      %c0_14 = arith.constant 0 : index
      %14 = vector.load %arg3[%c0_13, %c0_14] : memref<1x128xf32, #tpu.memory_space<vmem>>, vector<1x128xf32>
      %c0_15 = arith.constant 0 : index
      %c0_16 = arith.constant 0 : index
      %15 = vector.load %arg4[%c0_15, %c0_16] : memref<1x128xf32, #tpu.memory_space<vmem>>, vector<1x128xf32>
      %c0_17 = arith.constant 0 : index
      %c0_18 = arith.constant 0 : index
      %16 = vector.load %arg5[%c0_17, %c0_18] : memref<1x128xf32, #tpu.memory_space<vmem>>, vector<1x128xf32>
      %17 = vector.broadcast %14 : vector<1x128xf32> to vector<16x128xf32>
      %18 = arith.addf %13, %17 : vector<16x128xf32>
      %cst_19 = arith.constant 5.000000e-01 : f32
      %19 = vector.broadcast %cst_19 : f32 to vector<16x128xf32>
      %20 = arith.mulf %19, %18 : vector<16x128xf32>
      %cst_20 = arith.constant 0.707106769 : f32
      %21 = vector.broadcast %cst_20 : f32 to vector<16x128xf32>
      %22 = arith.mulf %18, %21 : vector<16x128xf32>
      %23 = math.erf %22 : vector<16x128xf32>
      %cst_21 = arith.constant 1.000000e+00 : f32
      %24 = vector.broadcast %cst_21 : f32 to vector<16x128xf32>
      %25 = arith.addf %24, %23 : vector<16x128xf32>
      %26 = arith.mulf %20, %25 : vector<16x128xf32>
      %cst_22 = arith.constant dense<0.000000e+00> : vector<16xf32>
      %27 = vector.multi_reduction <add>, %26, %cst_22 [1] : vector<16x128xf32> to vector<16xf32>
      %28 = vector.shape_cast %27 : vector<16xf32> to vector<16x1xf32>
      %cst_23 = arith.constant 1.280000e+02 : f32
      %29 = vector.broadcast %cst_23 : f32 to vector<16x1xf32>
      %30 = arith.divf %28, %29 : vector<16x1xf32>
      %31 = vector.broadcast %30 : vector<16x1xf32> to vector<16x128xf32>
      %32 = arith.subf %26, %31 : vector<16x128xf32>
      %33 = arith.mulf %32, %32 : vector<16x128xf32>
      %cst_24 = arith.constant dense<0.000000e+00> : vector<16xf32>
      %34 = vector.multi_reduction <add>, %33, %cst_24 [1] : vector<16x128xf32> to vector<16xf32>
      %35 = vector.shape_cast %34 : vector<16xf32> to vector<16x1xf32>
      %cst_25 = arith.constant 1.280000e+02 : f32
      %36 = vector.broadcast %cst_25 : f32 to vector<16x1xf32>
      %37 = arith.divf %35, %36 : vector<16x1xf32>
      %cst_26 = arith.constant 9.99999974E-6 : f32
      %38 = vector.broadcast %cst_26 : f32 to vector<16x1xf32>
      %39 = arith.addf %37, %38 : vector<16x1xf32>
      %40 = math.rsqrt %39 : vector<16x1xf32>
      %41 = vector.broadcast %40 : vector<16x1xf32> to vector<16x128xf32>
      %42 = arith.mulf %32, %41 : vector<16x128xf32>
      %43 = vector.broadcast %15 : vector<1x128xf32> to vector<16x128xf32>
      %44 = arith.mulf %42, %43 : vector<16x128xf32>
      %45 = vector.broadcast %16 : vector<1x128xf32> to vector<16x128xf32>
      %46 = arith.addf %44, %45 : vector<16x128xf32>
      %47 = arith.truncf %46 : vector<16x128xf32> to vector<16x128xbf16>
      %c0_27 = arith.constant 0 : index
      %c0_28 = arith.constant 0 : index
      %48 = vector.load %arg9[%c0_27, %c0_28] : memref<16x128xbf16, #tpu.memory_space<vmem>>, vector<16x128xbf16>
      tpu.vector_store %arg9[%c0_27, %c0_28], %47 {strides = array<i32>} : memref<16x128xbf16, #tpu.memory_space<vmem>>, vector<16x128xbf16>,
    } else {
    }
    %c0 = arith.constant 0 : index
    %c0_1 = arith.constant 0 : index
    %3 = vector.load %arg9[%c0, %c0_1] : memref<16x128xbf16, #tpu.memory_space<vmem>>, vector<16x128xbf16>
    %c0_2 = arith.constant 0 : index
    %c0_3 = arith.constant 0 : index
    %4 = vector.load %arg6[%c0_2, %c0_3] : memref<128x384xbf16, #tpu.memory_space<vmem>>, vector<128x384xbf16>
    %cst = arith.constant dense<0.000000e+00> : vector<16x384xf32>
    %5 = tpu.matmul %3, %4, %cst {dimension_numbers = #tpu.dot_dimension_numbers<[1], [0], [0], [1], [0, 0, 1, 1], [], []>} : vector<16x128xbf16>, vector<128x384xbf16>, vector<16x384xf32> -> vector<16x384xf32>
    %c0_4 = arith.constant 0 : index
    %c0_5 = arith.constant 0 : index
    %6 = vector.load %arg7[%c0_4, %c0_5] : memref<1x384xf32, #tpu.memory_space<vmem>>, vector<1x384xf32>
    %7 = vector.broadcast %6 : vector<1x384xf32> to vector<16x384xf32>
    %8 = arith.addf %5, %7 : vector<16x384xf32>
    %9 = arith.truncf %8 : vector<16x384xf32> to vector<16x384xbf16>
    %c0_6 = arith.constant 0 : index
    %c0_7 = arith.constant 0 : index
    %10 = vector.load %arg8[%c0_6, %c0_7] : memref<16x384xbf16, #tpu.memory_space<vmem>>, vector<16x384xbf16>
    tpu.vector_store %arg8[%c0_6, %c0_7], %9 {strides = array<i32>} : memref<16x384xbf16, #tpu.memory_space<vmem>>, vector<16x384xbf16>,
    return
  }
  func.func @transform_0(%arg0: i32) -> (i32, i32) {
    %c0_i32 = arith.constant 0 : i32
    %c0_i32_0 = arith.constant 0 : i32
    %c0_i32_1 = arith.constant 0 : i32
    return %c0_i32, %c0_i32_0 : i32, i32
  }
  func.func @transform_1(%arg0: i32) -> (i32, i32) {
    %c0_i32 = arith.constant 0 : i32
    %c0_i32_0 = arith.constant 0 : i32
    %c0_i32_1 = arith.constant 0 : i32
    return %c0_i32, %c0_i32_0 : i32, i32
  }
  func.func @transform_2(%arg0: i32) -> (i32, i32) {
    %c0_i32 = arith.constant 0 : i32
    %c0_i32_0 = arith.constant 0 : i32
    %c0_i32_1 = arith.constant 0 : i32
    return %c0_i32, %c0_i32_0 : i32, i32
  }
  func.func @transform_3(%arg0: i32) -> (i32, i32) {
    %c0_i32 = arith.constant 0 : i32
    %c0_i32_0 = arith.constant 0 : i32
    %c0_i32_1 = arith.constant 0 : i32
    return %c0_i32, %c0_i32_0 : i32, i32
  }
  func.func @transform_4(%arg0: i32) -> (i32, i32) {
    %c0_i32 = arith.constant 0 : i32
    %c0_i32_0 = arith.constant 0 : i32
    %c0_i32_1 = arith.constant 0 : i32
    return %c0_i32, %c0_i32_0 : i32, i32
  }
  func.func @transform_5(%arg0: i32) -> (i32, i32) {
    %c0_i32 = arith.constant 0 : i32
    %c0_i32_0 = arith.constant 0 : i32
    return %c0_i32, %arg0 : i32, i32
  }
  func.func @transform_6(%arg0: i32) -> (i32, i32) {
    %c0_i32 = arith.constant 0 : i32
    %c0_i32_0 = arith.constant 0 : i32
    return %c0_i32, %arg0 : i32, i32
  }
  func.func @transform_7(%arg0: i32) -> (i32, i32) {
    %c0_i32 = arith.constant 0 : i32
    %c0_i32_0 = arith.constant 0 : i32
    return %c0_i32, %arg0 : i32, i32
  }
}

</mosaic_0001>

<llo_original>
// kernel: tpu_custom_call.1
$region0: #{tpu_custom_call.1}
  #allocation0 [shape = 'u32[]', space=smem, size = 0x4, offset = 0x4, fixed_abs, tag = 'smem constant byte address 0x4 - core index']
  #allocation1 [shape = 'u32[144,128]{1,0:T(1,128)}', space=vmem, size = 0x12000, scoped, tag = 'internal scratch']
  #allocation2 [shape = 'bf16[16,128]{1,0:T(16,128)(2,1)}', space=vmem, size = 0x1000, scoped, tag = 'scratch operand']
  %s0 = inlined_call_operand.vmem [shape: bf16[16,128], index: 0, kind: input, shape index: {}]
  %s1 = inlined_call_operand.vmem [shape: bf16[128,128], index: 1, kind: input, shape index: {}]
  %s2 = inlined_call_operand.vmem [shape: f32[1,128], index: 2, kind: input, shape index: {}]
  %s3 = inlined_call_operand.vmem [shape: f32[1,128], index: 3, kind: input, shape index: {}]
  %s4 = inlined_call_operand.vmem [shape: f32[1,128], index: 4, kind: input, shape index: {}]
  %s5 = inlined_call_operand.vmem [shape: bf16[128,300], index: 5, kind: input, shape index: {}]
  %s6 = inlined_call_operand.vmem [shape: f32[1,300], index: 6, kind: input, shape index: {}]
  %s7 = inlined_call_operand.hbm [shape: bf16[16,300], index: 7, kind: output, shape index: {}]
  %s8 = sld [smem:[#allocation0]]
  $region42: #{tpu_custom_call.1} parent=0
    _
  %s10 = ssub.s32 1, %s8
  %s11 = scalar_select 0, %s10, %s8
  $region1: #{tpu_custom_call.1} parent=0
    #allocation3 [shape = 'u8[12288]{0}', space=vmem, size = 0x3000, scoped, tag = 'output window, operand 0, single buffered']
    #allocation4 [shape = 's32[1]{0}', space=sflag, size = 0x4, scoped, tag = 'scoped memory for tpu_custom_call.1']
    %12 = vsyncpa [#allocation4], 0
    // Predicated region
    $region2: #{tpu_custom_call.1} parent=1 // pred_check
      _
    $region3: #{tpu_custom_call.1} parent=1 // pred_check_branch
      %14 = sbr.rel (0) target = $region5
    $region4: #{tpu_custom_call.1} parent=1 // pred_region
      _
    $region5: #{tpu_custom_call.1} parent=1 // pred_fallthru
      _
    // Predicated region
    $region6: #{tpu_custom_call.1} parent=1 // pred_check
      _
    $region7: #{tpu_custom_call.1} parent=1 // pred_check_branch
      %16 = sbr.rel (0) target = $region9
    $region8: #{tpu_custom_call.1} parent=1 // pred_region
      _
    $region9: #{tpu_custom_call.1} parent=1 // pred_fallthru
      _
    // Predicated region
    $region10: #{tpu_custom_call.1} parent=1 // pred_check
      _
    $region11: #{tpu_custom_call.1} parent=1 // pred_check_branch
      %18 = sbr.rel (0) target = $region13
    $region12: #{tpu_custom_call.1} parent=1 // pred_region
      _
    $region13: #{tpu_custom_call.1} parent=1 // pred_fallthru
      _
    // Predicated region
    $region14: #{tpu_custom_call.1} parent=1 // pred_check
      _
    $region15: #{tpu_custom_call.1} parent=1 // pred_check_branch
      %20 = sbr.rel (0) target = $region17
    $region16: #{tpu_custom_call.1} parent=1 // pred_region
      _
    $region17: #{tpu_custom_call.1} parent=1 // pred_fallthru
      _
    // Predicated region
    $region18: #{tpu_custom_call.1} parent=1 // pred_check
      _
    $region19: #{tpu_custom_call.1} parent=1 // pred_check_branch
      %22 = sbr.rel (0) target = $region21
    $region20: #{tpu_custom_call.1} parent=1 // pred_region
      _
    $region21: #{tpu_custom_call.1} parent=1 // pred_fallthru
      _
    // Predicated region
    $region22: #{tpu_custom_call.1} parent=1 // pred_check
      _
    $region23: #{tpu_custom_call.1} parent=1 // pred_check_branch
      %24 = sbr.rel (0) target = $region25
    $region24: #{tpu_custom_call.1} parent=1 // pred_region
      _
    $region25: #{tpu_custom_call.1} parent=1 // pred_fallthru
      _
    // Predicated region
    $region26: #{tpu_custom_call.1} parent=1 // pred_check
      _
    $region27: #{tpu_custom_call.1} parent=1 // pred_check_branch
      %26 = sbr.rel (0) target = $region29
    $region28: #{tpu_custom_call.1} parent=1 // pred_region
      _
    $region29: #{tpu_custom_call.1} parent=1 // pred_fallthru
      _
    %p28 = scmp.eq.s32.totalorder 0, 0
    // Predicated region
    $region30: #{tpu_custom_call.1} parent=1 // pred_check
      %p29 = pneg %p28
    $region31: #{tpu_custom_call.1} parent=1 // pred_check_branch
      %31 = sbr.rel (%p29) target = $region33
    $region32: #{tpu_custom_call.1} parent=1 // pred_region
      %v32 = vld [vmem:[%s0] sm:$0xf]
      %v33 = vld [vmem:[%s0 + $0x4] sm:$0xf]
      %v34 = vld [vmem:[%s1] sm:$0xf]
      %v35 = vld [vmem:[%s1 + $0x4] sm:$0xf]
      %v36 = vld [vmem:[%s1 + $0x8] sm:$0xf]
      %v37 = vld [vmem:[%s1 + $0xc] sm:$0xf]
      %v38 = vld [vmem:[%s1 + $0x10] sm:$0xf]
      %v39 = vld [vmem:[%s1 + $0x14] sm:$0xf]
      %v40 = vld [vmem:[%s1 + $0x18] sm:$0xf]
      %v41 = vld [vmem:[%s1 + $0x1c] sm:$0xf]
      %v42 = vld [vmem:[%s1 + $0x20] sm:$0xf]
      %v43 = vld [vmem:[%s1 + $0x24] sm:$0xf]
      %v44 = vld [vmem:[%s1 + $0x28] sm:$0xf]
      %v45 = vld [vmem:[%s1 + $0x2c] sm:$0xf]
      %v46 = vld [vmem:[%s1 + $0x30] sm:$0xf]
      %v47 = vld [vmem:[%s1 + $0x34] sm:$0xf]
      %v48 = vld [vmem:[%s1 + $0x38] sm:$0xf]
      %v49 = vld [vmem:[%s1 + $0x3c] sm:$0xf]
      %v50 = vld [vmem:[%s2] sm:$0x1]
      %v51 = vld [vmem:[%s3] sm:$0x1]
      %v52 = vld [vmem:[%s4] sm:$0x1]
      %v54 = vlaneseq
      %v55 = vshrl.u32 %v54, 7
      %v56 = vsub.s32 0, %v55
      %v57 = vrot.slane %v50, %v56
      %v61 = vunpack.c.l.b16 %v32
      %v62 = vunpack.c.l.b16 %v33
      %v63 = vpack.c.b16 %v62, %v61
      %v81 = vunpack.c.l.b16 %v34
      %v82 = vunpack.c.l.b16 %v35
      %v83 = vunpack.c.l.b16 %v36
      %v84 = vunpack.c.l.b16 %v37
      %v85 = vunpack.c.l.b16 %v38
      %v86 = vunpack.c.l.b16 %v39
      %v87 = vunpack.c.l.b16 %v40
      %v88 = vunpack.c.l.b16 %v41
      %v89 = vunpack.c.l.b16 %v42
      %v90 = vunpack.c.l.b16 %v43
      %v91 = vunpack.c.l.b16 %v44
      %v92 = vunpack.c.l.b16 %v45
      %v93 = vunpack.c.l.b16 %v46
      %v94 = vunpack.c.l.b16 %v47
      %v95 = vunpack.c.l.b16 %v48
      %v96 = vunpack.c.l.b16 %v49
      %v97 = vpack.c.b16 %v82, %v81
      %v98 = vpack.c.b16 %v84, %v83
      %v99 = vpack.c.b16 %v86, %v85
      %v100 = vpack.c.b16 %v88, %v87
      %v101 = vpack.c.b16 %v90, %v89
      %v102 = vpack.c.b16 %v92, %v91
      %v103 = vpack.c.b16 %v94, %v93
      %v104 = vpack.c.b16 %v96, %v95
      %113 = vmatprep.subr.bf16.mxu0 0
      %114 = vmatpush1.bf16.msra.mxu0 %v97
      %115 = vmatprep.subr.bf16.mxu0 0
      %116 = vmatpush1.bf16.msra.mxu0 %v98
      %117 = vmatprep.subr.bf16.mxu0 0
      %118 = vmatpush1.bf16.msra.mxu0 %v99
      %119 = vmatprep.subr.bf16.mxu0 0
      %120 = vmatpush1.bf16.msra.mxu0 %v100
      %121 = vmatprep.subr.bf16.mxu0 0
      %122 = vmatpush1.bf16.msra.mxu0 %v101
      %123 = vmatprep.subr.bf16.mxu0 0
      %124 = vmatpush1.bf16.msra.mxu0 %v102
      %125 = vmatprep.subr.bf16.mxu0 0
      %126 = vmatpush1.bf16.msra.mxu0 %v103
      %127 = vmatprep.subr.bf16.mxu0 0
      %128 = vmatpush1.bf16.msra.mxu0 %v104
      %129 = vmatprep.subr.bf16.mxu0 0
      %130 = vmatpush1.bf16.msra.mxu0 0
      %131 = vmatprep.subr.bf16.mxu0 0
      %132 = vmatpush1.bf16.msra.mxu0 0
      %133 = vmatprep.subr.bf16.mxu0 0
      %134 = vmatpush1.bf16.msra.mxu0 0
      %135 = vmatprep.subr.bf16.mxu0 0
      %136 = vmatpush1.bf16.msra.mxu0 0
      %137 = vmatprep.subr.bf16.mxu0 0
      %138 = vmatpush1.bf16.msra.mxu0 0
      %139 = vmatprep.subr.bf16.mxu0 0
      %140 = vmatpush1.bf16.msra.mxu0 0
      %141 = vmatprep.subr.bf16.mxu0 0
      %142 = vmatpush1.bf16.msra.mxu0 0
      %143 = vmatprep.subr.bf16.mxu0 0
      %144 = vmatpush1.bf16.msra.mxu0 0
      %145 = vmatprep.mubr.bf16.mxu0 0
      %146 = vmatmul.mubr.bf16.gmra.mrb[0].mxu0 %v63
      %v147 = vpop.f32.mrb[0].mxu0
      %v148 = vadd.f32 %v57, %v147
      %v149 = vpop.f32.mrb[0].mxu0
      %v150 = vpop.f32.mrb[0].mxu0
      %v151 = vadd.f32 %v57, %v150
      %v152 = vpop.f32.mrb[0].mxu0
      %153 = vdwg.mxu0
      %v154 = vmul.f32 %v148, 0.5
      %v155 = vmul.f32 %v151, 0.5
      %v156 = vmul.f32 %v148, 0.70710677
      %v157 = vmul.f32 %v151, 0.70710677
      %v158 = verf.f32.pop %v156
      %v159 = verf.f32.pop %v157
      %v160 = vadd.f32 %v158, 1.0
      %v161 = vadd.f32 %v159, 1.0
      %v162 = vmul.f32 %v154, %v160
      %v163 = vmul.f32 %v155, %v161
      %164 = vadd.xlane.f32.xlu0 %v162
      %v165 = vpop.xlane.xlu0 %164
      %166 = vadd.xlane.f32.xlu0 %v163
      %v167 = vpop.xlane.xlu0 %166
      %v168 = vrcp.pop 128.0
      %v169 = vmul.f32 %v165, %v168
      %v170 = vmul.f32 %v167, %v168
      %v171 = vsub.f32 %v162, %v169
      %v172 = vsub.f32 %v163, %v170
      %v173 = vmul.f32 %v171, %v171
      %v174 = vmul.f32 %v172, %v172
      %175 = vadd.xlane.f32.xlu0 %v173
      %v176 = vpop.xlane.xlu0 %175
      %177 = vadd.xlane.f32.xlu0 %v174
      %v178 = vpop.xlane.xlu0 %177
      %v179 = vmul.f32 %v176, %v168
      %v180 = vmul.f32 %v178, %v168
      %v181 = vadd.f32 %v179, 1e-05
      %v182 = vadd.f32 %v180, 1e-05
      %v183 = vrsqrt.pop %v181
      %v184 = vrsqrt.pop %v182
      %v185 = vmul.f32 %v171, %v183
      %v186 = vmul.f32 %v172, %v184
      %v188 = vlaneseq
      %v189 = vshrl.u32 %v188, 7
      %v190 = vsub.s32 0, %v189
      %v191 = vrot.slane %v51, %v190
      %v193 = vmul.f32 %v185, %v191
      %v194 = vmul.f32 %v186, %v191
      %v196 = vlaneseq
      %v197 = vshrl.u32 %v196, 7
      %v198 = vsub.s32 0, %v197
      %v199 = vrot.slane %v52, %v198
      %v201 = vadd.f32 %v193, %v199
      %v202 = vadd.f32 %v194, %v199
      %v203 = vpack.c.bf16 %v202, %v201
      %204 = vst [vmem:[#allocation2] sm:$0xff] %v203
    $region33: #{tpu_custom_call.1} parent=1 // pred_fallthru
      _
    %v205 = vld [vmem:[#allocation2] sm:$0xff]
    %v206 = vld [vmem:[%s5] sm:$0xff]
    %v207 = vld [vmem:[%s5 + $0x8] sm:$0xf]
    %v208 = vld [vmem:[%s5 + $0xc] sm:$0xff]
    %v209 = vld [vmem:[%s5 + $0x14] sm:$0xf]
    %v210 = vld [vmem:[%s5 + $0x18] sm:$0xff]
    %v211 = vld [vmem:[%s5 + $0x20] sm:$0xf]
    %v212 = vld [vmem:[%s5 + $0x24] sm:$0xff]
    %v213 = vld [vmem:[%s5 + $0x2c] sm:$0xf]
    %v214 = vld [vmem:[%s5 + $0x30] sm:$0xff]
    %v215 = vld [vmem:[%s5 + $0x38] sm:$0xf]
    %v216 = vld [vmem:[%s5 + $0x3c] sm:$0xff]
    %v217 = vld [vmem:[%s5 + $0x44] sm:$0xf]
    %v218 = vld [vmem:[%s5 + $0x48] sm:$0xff]
    %v219 = vld [vmem:[%s5 + $0x50] sm:$0xf]
    %v220 = vld [vmem:[%s5 + $0x54] sm:$0xff]
    %v221 = vld [vmem:[%s5 + $0x5c] sm:$0xf]
    %v222 = vld [vmem:[%s5 + $0x60] sm:$0xff]
    %v223 = vld [vmem:[%s5 + $0x68] sm:$0xf]
    %v224 = vld [vmem:[%s5 + $0x6c] sm:$0xff]
    %v225 = vld [vmem:[%s5 + $0x74] sm:$0xf]
    %v226 = vld [vmem:[%s5 + $0x78] sm:$0xff]
    %v227 = vld [vmem:[%s5 + $0x80] sm:$0xf]
    %v228 = vld [vmem:[%s5 + $0x84] sm:$0xff]
    %v229 = vld [vmem:[%s5 + $0x8c] sm:$0xf]
    %v230 = vld [vmem:[%s5 + $0x90] sm:$0xff]
    %v231 = vld [vmem:[%s5 + $0x98] sm:$0xf]
    %v232 = vld [vmem:[%s5 + $0x9c] sm:$0xff]
    %v233 = vld [vmem:[%s5 + $0xa4] sm:$0xf]
    %v234 = vld [vmem:[%s5 + $0xa8] sm:$0xff]
    %v235 = vld [vmem:[%s5 + $0xb0] sm:$0xf]
    %v236 = vld [vmem:[%s5 + $0xb4] sm:$0xff]
    %v237 = vld [vmem:[%s5 + $0xbc] sm:$0xf]
    %v238 = vld [vmem:[%s6] sm:$0x7]
    %v240 = vlaneseq
    %v241 = vshrl.u32 %v240, 7
    %v242 = vsub.s32 0, %v241
    %v243 = vrot.slane %v238, %v242
    %v244 = vlaneseq
    %v245 = vshrl.u32 %v244, 7
    %v246 = vsub.s32 1, %v245
    %v247 = vrot.slane %v238, %v246
    %v248 = vlaneseq
    %v249 = vshrl.u32 %v248, 7
    %v250 = vsub.s32 2, %v249
    %v251 = vrot.slane %v238, %v250
    %v287 = vunpack.c.l.b16 %v206
    %v288 = vunpack.c.h.b16 %v206
    %v289 = vunpack.c.l.b16 %v207
    %v290 = vunpack.c.l.b16 %v208
    %v291 = vunpack.c.h.b16 %v208
    %v292 = vunpack.c.l.b16 %v209
    %v293 = vunpack.c.l.b16 %v210
    %v294 = vunpack.c.h.b16 %v210
    %v295 = vunpack.c.l.b16 %v211
    %v296 = vunpack.c.l.b16 %v212
    %v297 = vunpack.c.h.b16 %v212
    %v298 = vunpack.c.l.b16 %v213
    %v299 = vunpack.c.l.b16 %v214
    %v300 = vunpack.c.h.b16 %v214
    %v301 = vunpack.c.l.b16 %v215
    %v302 = vunpack.c.l.b16 %v216
    %v303 = vunpack.c.h.b16 %v216
    %v304 = vunpack.c.l.b16 %v217
    %v305 = vunpack.c.l.b16 %v218
    %v306 = vunpack.c.h.b16 %v218
    %v307 = vunpack.c.l.b16 %v219
    %v308 = vunpack.c.l.b16 %v220
    %v309 = vunpack.c.h.b16 %v220
    %v310 = vunpack.c.l.b16 %v221
    %v311 = vunpack.c.l.b16 %v222
    %v312 = vunpack.c.h.b16 %v222
    %v313 = vunpack.c.l.b16 %v223
    %v314 = vunpack.c.l.b16 %v224
    %v315 = vunpack.c.h.b16 %v224
    %v316 = vunpack.c.l.b16 %v225
    %v317 = vunpack.c.l.b16 %v226
    %v318 = vunpack.c.h.b16 %v226
    %v319 = vunpack.c.l.b16 %v227
    %v320 = vunpack.c.l.b16 %v228
    %v321 = vunpack.c.h.b16 %v228
    %v322 = vunpack.c.l.b16 %v229
    %v323 = vunpack.c.l.b16 %v230
    %v324 = vunpack.c.h.b16 %v230
    %v325 = vunpack.c.l.b16 %v231
    %v326 = vunpack.c.l.b16 %v232
    %v327 = vunpack.c.h.b16 %v232
    %v328 = vunpack.c.l.b16 %v233
    %v329 = vunpack.c.l.b16 %v234
    %v330 = vunpack.c.h.b16 %v234
    %v331 = vunpack.c.l.b16 %v235
    %v332 = vunpack.c.l.b16 %v236
    %v333 = vunpack.c.h.b16 %v236
    %v334 = vunpack.c.l.b16 %v237
    %v335 = vpack.c.b16 %v290, %v287
    %v336 = vpack.c.b16 %v291, %v288
    %v337 = vpack.c.b16 %v292, %v289
    %v338 = vpack.c.b16 %v296, %v293
    %v339 = vpack.c.b16 %v297, %v294
    %v340 = vpack.c.b16 %v298, %v295
    %v341 = vpack.c.b16 %v302, %v299
    %v342 = vpack.c.b16 %v303, %v300
    %v343 = vpack.c.b16 %v304, %v301
    %v344 = vpack.c.b16 %v308, %v305
    %v345 = vpack.c.b16 %v309, %v306
    %v346 = vpack.c.b16 %v310, %v307
    %v347 = vpack.c.b16 %v314, %v311
    %v348 = vpack.c.b16 %v315, %v312
    %v349 = vpack.c.b16 %v316, %v313
    %v350 = vpack.c.b16 %v320, %v317
    %v351 = vpack.c.b16 %v321, %v318
    %v352 = vpack.c.b16 %v322, %v319
    %v353 = vpack.c.b16 %v326, %v323
    %v354 = vpack.c.b16 %v327, %v324
    %v355 = vpack.c.b16 %v328, %v325
    %v356 = vpack.c.b16 %v332, %v329
    %v357 = vpack.c.b16 %v333, %v330
    %v358 = vpack.c.b16 %v334, %v331
    %383 = vmatprep.subr.bf16.mxu0 %v336
    %384 = vmatpush1.bf16.msra.mxu0 %v335
    %385 = vmatprep.subr.bf16.mxu0 %v339
    %386 = vmatpush1.bf16.msra.mxu0 %v338
    %387 = vmatprep.subr.bf16.mxu0 %v342
    %388 = vmatpush1.bf16.msra.mxu0 %v341
    %389 = vmatprep.subr.bf16.mxu0 %v345
    %390 = vmatpush1.bf16.msra.mxu0 %v344
    %391 = vmatprep.subr.bf16.mxu0 %v348
    %392 = vmatpush1.bf16.msra.mxu0 %v347
    %393 = vmatprep.subr.bf16.mxu0 %v351
    %394 = vmatpush1.bf16.msra.mxu0 %v350
    %395 = vmatprep.subr.bf16.mxu0 %v354
    %396 = vmatpush1.bf16.msra.mxu0 %v353
    %397 = vmatprep.subr.bf16.mxu0 %v357
    %398 = vmatpush1.bf16.msra.mxu0 %v356
    %399 = vmatprep.subr.bf16.mxu0 0
    %400 = vmatpush1.bf16.msra.mxu0 0
    %401 = vmatprep.subr.bf16.mxu0 0
    %402 = vmatpush1.bf16.msra.mxu0 0
    %403 = vmatprep.subr.bf16.mxu0 0
    %404 = vmatpush1.bf16.msra.mxu0 0
    %405 = vmatprep.subr.bf16.mxu0 0
    %406 = vmatpush1.bf16.msra.mxu0 0
    %407 = vmatprep.subr.bf16.mxu0 0
    %408 = vmatpush1.bf16.msra.mxu0 0
    %409 = vmatprep.subr.bf16.mxu0 0
    %410 = vmatpush1.bf16.msra.mxu0 0
    %411 = vmatprep.subr.bf16.mxu0 0
    %412 = vmatpush1.bf16.msra.mxu0 0
    %413 = vmatprep.subr.bf16.mxu0 0
    %414 = vmatpush1.bf16.msra.mxu0 0
    %415 = vmatprep.mubr.bf16.mxu0 0
    %416 = vmatmul.mubr.bf16.gmra.mrb[0].mxu0 %v205
    %v417 = vpop.f32.mrb[0].mxu0
    %v418 = vadd.f32 %v243, %v417
    %v419 = vpop.f32.mrb[0].mxu0
    %v420 = vadd.f32 %v247, %v419
    %v421 = vpop.f32.mrb[0].mxu0
    %v422 = vadd.f32 %v243, %v421
    %v423 = vpop.f32.mrb[0].mxu0
    %v424 = vadd.f32 %v247, %v423
    %425 = vdwg.mxu0
    %426 = vmatprep.subr.bf16.mxu0 0
    %427 = vmatpush1.bf16.msra.mxu0 %v337
    %428 = vmatprep.subr.bf16.mxu0 0
    %429 = vmatpush1.bf16.msra.mxu0 %v340
    %430 = vmatprep.subr.bf16.mxu0 0
    %431 = vmatpush1.bf16.msra.mxu0 %v343
    %432 = vmatprep.subr.bf16.mxu0 0
    %433 = vmatpush1.bf16.msra.mxu0 %v346
    %434 = vmatprep.subr.bf16.mxu0 0
    %435 = vmatpush1.bf16.msra.mxu0 %v349
    %436 = vmatprep.subr.bf16.mxu0 0
    %437 = vmatpush1.bf16.msra.mxu0 %v352
    %438 = vmatprep.subr.bf16.mxu0 0
    %439 = vmatpush1.bf16.msra.mxu0 %v355
    %440 = vmatprep.subr.bf16.mxu0 0
    %441 = vmatpush1.bf16.msra.mxu0 %v358
    %442 = vmatprep.subr.bf16.mxu0 0
    %443 = vmatpush1.bf16.msra.mxu0 0
    %444 = vmatprep.subr.bf16.mxu0 0
    %445 = vmatpush1.bf16.msra.mxu0 0
    %446 = vmatprep.subr.bf16.mxu0 0
    %447 = vmatpush1.bf16.msra.mxu0 0
    %448 = vmatprep.subr.bf16.mxu0 0
    %449 = vmatpush1.bf16.msra.mxu0 0
    %450 = vmatprep.subr.bf16.mxu0 0
    %451 = vmatpush1.bf16.msra.mxu0 0
    %452 = vmatprep.subr.bf16.mxu0 0
    %453 = vmatpush1.bf16.msra.mxu0 0
    %454 = vmatprep.subr.bf16.mxu0 0
    %455 = vmatpush1.bf16.msra.mxu0 0
    %456 = vmatprep.subr.bf16.mxu0 0
    %457 = vmatpush1.bf16.msra.mxu0 0
    %458 = vmatprep.mubr.bf16.mxu0 0
    %459 = vmatmul.mubr.bf16.gmra.mrb[0].mxu0 %v205
    %v460 = vpop.f32.mrb[0].mxu0
    %v461 = vadd.f32 %v251, %v460
    %v462 = vpop.f32.mrb[0].mxu0
    %v463 = vpop.f32.mrb[0].mxu0
    %v464 = vadd.f32 %v251, %v463
    %v465 = vpop.f32.mrb[0].mxu0
    %466 = vdwg.mxu0
    %v467 = vpack.c.bf16 %v422, %v418
    %v468 = vpack.c.bf16 %v424, %v420
    %v469 = vpack.c.bf16 %v464, %v461
    %v473 = vunpack.c.l.b16 %v467
    %v474 = vunpack.c.l.b16 %v468
    %v475 = vunpack.c.l.b16 %v469
    %v476 = vunpack.c.h.b16 %v467
    %v477 = vunpack.c.h.b16 %v468
    %v478 = vunpack.c.h.b16 %v469
    %v479 = vpack.c.b16 %v474, %v473
    %v480 = vpack.c.b16 %v475, %v475
    %v481 = vpack.c.b16 %v477, %v476
    %v482 = vpack.c.b16 %v478, %v478
    %487 = vst [vmem:[#allocation3] sm:$0xff] %v479
    %488 = vst [vmem:[#allocation3 + $0x8] sm:$0xf] %v480
    %489 = vst [vmem:[#allocation3 + $0xc] sm:$0xff] %v481
    %490 = vst [vmem:[#allocation3 + $0x14] sm:$0xf] %v482
    // Predicated region
    $region34: #{tpu_custom_call.1} parent=1 // pred_check
      _
    $region35: #{tpu_custom_call.1} parent=1 // pred_check_branch
      %492 = sbr.rel (0) target = $region37
    $region36: #{tpu_custom_call.1} parent=1 // pred_region
      %s494 = ssub.s32 384, 384
      %495 = vsyncadd [#allocation4], %s494
      %s496 = sshll.u32 [#allocation3], 4
      %s497 = int_to_ptr.vmem [resolvable:$true] %s496
      %502 = dma.vmem_to_hbm [thread:$0]  %s497, 384, %s7, [#allocation4], 192, 192, 12
    $region37: #{tpu_custom_call.1} parent=1 // pred_fallthru
      _
    // Predicated region
    $region38: #{tpu_custom_call.1} parent=1 // pred_check
      _
    $region39: #{tpu_custom_call.1} parent=1 // pred_check_branch
      %504 = sbr.rel (0) target = $region41
    $region40: #{tpu_custom_call.1} parent=1 // pred_region
      %505 = dma.done [#allocation4], 384
    $region41: #{tpu_custom_call.1} parent=1 // pred_fallthru
      _
    %506 = vsyncpa [#allocation4], 1

</llo_original>
